<compile_context>
chip_gen: v6e
topology: v6e:2x2x1
jax: 0.10.0
libtpu: 0.0.40
codegen_flags: <defaults>
</compile_context>

<pallas_src>
import functools

import jax
import jax.numpy as jnp
from jax.experimental import pallas as pl
from jax.experimental.pallas import tpu as pltpu


def _round_up(x, m):
    return ((x + m - 1) // m) * m


def _pick_time_tile(T):
    # Lane-dense tiling: last dim a multiple of 128 when possible, capped so
    # double-buffered in+out blocks stay far below the v7x 64 MiB VMEM.
    if T % 128 != 0:
        return T  # lane-sparse fallback: one full-T block
    for tt in (2048, 1024, 512, 256, 128):
        if tt <= T and T % tt == 0:
            return tt
    return T


def _band_mask_kernel(tbl_ref, x_ref, o_ref, *, band_h):
    # Grid = (B, n_time_tiles, 2).  tbl_ref (SMEM, (B, 4) int32) holds per
    # batch: [blk0, blk1, lo, hi] where blk0/blk1 are the F-block indices
    # containing the first/last masked row.
    b = pl.program_id(0)
    j = pl.program_id(2)
    row0 = tbl_ref[b, j] * band_h          # global row of this block's top
    lo = tbl_ref[b, 2]
    hi = tbl_ref[b, 3]
    # Per-row keep mask at (1, band_h, 1); jnp.where broadcasts it over time.
    rows = row0 + jax.lax.broadcasted_iota(jnp.int32, (1, band_h, 1), 1)
    keep = jnp.logical_or(rows < lo, rows >= hi)
    x = x_ref[...]
    o_ref[...] = jnp.where(keep, x, jnp.zeros_like(x))


def _full_mask_kernel(tbl_ref, x_ref, o_ref):
    # Fallback: grid = (B, n_time_tiles); whole-F block per step.
    b = pl.program_id(0)
    lo = tbl_ref[b, 0]
    hi = tbl_ref[b, 1]
    f_blk = x_ref.shape[1]
    rows = jax.lax.broadcasted_iota(jnp.int32, (1, f_blk, 1), 1)
    keep = jnp.logical_or(rows < lo, rows >= hi)
    x = x_ref[...]
    o_ref[...] = jnp.where(keep, x, jnp.zeros_like(x))


def frequency_mask_pallas(x_bft, f_low, f_width, max_width):
    """x_bft: (B, F, T). f_low, f_width: (B,) int32. Returns masked (B, F, T)."""
    B, F, T = x_bft.shape
    t_tile = _pick_time_tile(T)
    n_t = T // t_tile

    lo = f_low.astype(jnp.int32)
    hi = (f_low + f_width).astype(jnp.int32)

    # Band block height: multiple of 8 sublanes (f32) covering any possible
    # width, so the mask band spans at most two consecutive F-blocks.
    band_h = max(8, _round_up(int(max_width), 8))

    if band_h <= F and F % band_h == 0:
        # ---- In-place band-only path (output aliases input) ----
        blk0 = lo // band_h
        blk1 = (hi - 1) // band_h          # == blk0 or blk0 + 1 (width <= band_h)
        tbl = jnp.stack([blk0, blk1, lo, hi], axis=1).astype(jnp.int32)

        grid_spec = pltpu.PrefetchScalarGridSpec(
            num_scalar_prefetch=1,
            grid=(B, n_t, 2),
            in_specs=[
                pl.BlockSpec((1, band_h, t_tile),
                             lambda b, t, j, tbl: (b, tbl[b, j], t)),
            ],
            out_specs=pl.BlockSpec((1, band_h, t_tile),
                                   lambda b, t, j, tbl: (b, tbl[b, j], t)),
        )
        return pl.pallas_call(
            functools.partial(_band_mask_kernel, band_h=band_h),
            out_shape=jax.ShapeDtypeStruct((B, F, T), x_bft.dtype),
            grid_spec=grid_spec,
            # Inputs are (tbl, x); x (index 1, counting the scalar-prefetch
            # operand) aliases output 0 -> untouched rows are never re-written.
            input_output_aliases={1: 0},
            compiler_params=pltpu.CompilerParams(
                dimension_semantics=("parallel", "parallel", "arbitrary"),
                vmem_limit_bytes=32 * 1024 * 1024),
        )(tbl, x_bft)

    # ---- Fallback: full read+write, tiled over time, broadcast row mask ----
    # TODO(synk): extend the aligned band path to F not divisible by band_h
    # (partial last F-block) instead of falling back to a full-tensor pass.
    tbl = jnp.stack([lo, hi], axis=1).astype(jnp.int32)
    grid_spec = pltpu.PrefetchScalarGridSpec(
        num_scalar_prefetch=1,
        grid=(B, n_t),
        in_specs=[pl.BlockSpec((1, F, t_tile), lambda b, t, tbl: (b, 0, t))],
        out_specs=pl.BlockSpec((1, F, t_tile), lambda b, t, tbl: (b, 0, t)),
    )
    return pl.pallas_call(
        _full_mask_kernel,
        out_shape=jax.ShapeDtypeStruct((B, F, T), x_bft.dtype),
        grid_spec=grid_spec,
        compiler_params=pltpu.CompilerParams(
            dimension_semantics=("parallel", "parallel"),
            vmem_limit_bytes=32 * 1024 * 1024),
    )(tbl, x_bft)


class FrequencyMaskAugmentation:
    """JAX/Pallas port of the PyTorch FrequencyMaskAugmentation module."""

    def __init__(self, mask_ratio=16):
        self.mask_ratio = mask_ratio

    def __call__(self, x, key):
        # x: (B, 1, F, T) — NCHW with a single channel, like the torch module.
        B, C, F, T = x.shape
        assert C == 1, "FrequencyMaskAugmentation expects a single channel dim"
        x_bft = jnp.squeeze(x, axis=1)

        max_mask = F // self.mask_ratio
        k_w, k_lo = jax.random.split(key)
        if max_mask <= 1:
            f_width = jnp.ones((B,), dtype=jnp.int32)
            max_width = 1
        else:
            # Matches torch.randint(low=1, high=max_mask): widths in {1..max_mask-1}.
            f_width = jax.random.randint(
                k_w, (B,), minval=1, maxval=max_mask, dtype=jnp.int32)
            max_width = max_mask - 1
        # f_low ~ Uniform{0, ..., F - f_width - 1}  (matches torch.randint bounds).
        u = jax.random.uniform(k_lo, (B,), dtype=jnp.float32)
        f_low = jnp.floor(u * (F - f_width).astype(jnp.float32)).astype(jnp.int32)

        out_bft = frequency_mask_pallas(x_bft, f_low, f_width, max_width)
        return jnp.expand_dims(out_bft, axis=1)


if __name__ == "__main__":
    key = jax.random.PRNGKey(0)
    k_data, k_aug = jax.random.split(key)

    # Small spectrogram-like shape; T=128 keeps the last dim lane-dense,
    # F=64 with mask_ratio=16 -> max_mask=4, widths in {1,2,3}.
    B, C, F, T = 4, 1, 64, 128
    x = jax.random.normal(k_data, (B, C, F, T), dtype=jnp.float32)

    aug = FrequencyMaskAugmentation(mask_ratio=16)
    y = jax.block_until_ready(aug(x, k_aug))

    assert y.shape == (B, C, F, T)

    # Exact reference: mirror the RNG draws done inside __call__.
    max_mask = F // 16
    k_w, k_lo = jax.random.split(k_aug)
    f_width = jax.random.randint(k_w, (B,), minval=1, maxval=max_mask,
                                 dtype=jnp.int32)
    u = jax.random.uniform(k_lo, (B,), dtype=jnp.float32)
    f_low = jnp.floor(u * (F - f_width).astype(jnp.float32)).astype(jnp.int32)

    x_bft = jnp.squeeze(x, axis=1)
    rows = jnp.arange(F, dtype=jnp.int32)[None, :, None]
    keep = (rows < f_low[:, None, None]) | (rows >= (f_low + f_width)[:, None, None])
    ref = jnp.where(keep, x_bft, 0.0)

    y_bft = jnp.squeeze(y, axis=1)
    assert bool(jnp.allclose(y_bft, ref)), "kernel output != reference mask"
    # Each batch element has at least one fully-zeroed frequency row.
    row_zero = jnp.all(y_bft == 0.0, axis=-1)
    assert bool(jnp.all(jnp.any(row_zero, axis=-1)))
    # Unmasked rows are untouched.
    assert bool(jnp.allclose(jnp.where(row_zero[..., None], x_bft, y_bft), x_bft))

    print("KERNEL_OK")
</pallas_src>

<mosaic_0001>
module attributes {stable_mosaic.version = 11 : i64} {
  func.func @_band_mask_kernel(%arg0: i32, %arg1: i32, %arg2: i32, %arg3: memref<4x4xi32, #tpu.memory_space<smem>>, %arg4: memref<1x8x128xf32, #tpu.memory_space<vmem>>, %arg5: memref<1x8x128xf32, #tpu.memory_space<vmem>>) attributes {dimension_semantics = [#tpu.dimension_semantics<parallel>, #tpu.dimension_semantics<parallel>, #tpu.dimension_semantics<arbitrary>], iteration_bounds = array<i64: 4, 1, 2>, scalar_prefetch = 1 : i64, scratch_operands = 0 : i64, tpu.core_type = #tpu.core_type<tc>, window_params = [{transform_indices = @transform_0, window_bounds = array<i64: 1, 8, 128>}, {transform_indices = @transform_1, window_bounds = array<i64: 1, 8, 128>}]} {
    %0 = arith.index_cast %arg0 : i32 to index
    %1 = arith.index_cast %arg2 : i32 to index
    %2 = memref.load %arg3[%0, %1] : memref<4x4xi32, #tpu.memory_space<smem>>
    %c8_i32 = arith.constant 8 : i32
    %3 = arith.muli %2, %c8_i32 : i32
    %4 = arith.index_cast %arg0 : i32 to index
    %c2 = arith.constant 2 : index
    %5 = memref.load %arg3[%4, %c2] : memref<4x4xi32, #tpu.memory_space<smem>>
    %6 = arith.index_cast %arg0 : i32 to index
    %c3 = arith.constant 3 : index
    %7 = memref.load %arg3[%6, %c3] : memref<4x4xi32, #tpu.memory_space<smem>>
    %8 = tpu.iota {dimensions = array<i32: 1>} : vector<1x8x1xi32>
    %9 = vector.broadcast %3 : i32 to vector<1x8x1xi32>
    %10 = arith.addi %9, %8 : vector<1x8x1xi32>
    %11 = vector.broadcast %5 : i32 to vector<1x8x1xi32>
    %12 = arith.cmpi slt, %10, %11 : vector<1x8x1xi32>
    %13 = vector.broadcast %7 : i32 to vector<1x8x1xi32>
    %14 = arith.cmpi sge, %10, %13 : vector<1x8x1xi32>
    %15 = arith.ori %12, %14 : vector<1x8x1xi1>
    %c0 = arith.constant 0 : index
    %c0_0 = arith.constant 0 : index
    %c0_1 = arith.constant 0 : index
    %16 = vector.load %arg4[%c0, %c0_0, %c0_1] : memref<1x8x128xf32, #tpu.memory_space<vmem>>, vector<1x8x128xf32>
    %cst = arith.constant 0.000000e+00 : f32
    %17 = vector.broadcast %cst : f32 to vector<1x8x128xf32>
    %18 = vector.shape_cast %15 : vector<1x8x1xi1> to vector<1x8x1xi1>
    %19 = vector.broadcast %18 : vector<1x8x1xi1> to vector<1x8x128xi1>
    %20 = arith.select %19, %16, %17 : vector<1x8x128xi1>, vector<1x8x128xf32>
    %c0_2 = arith.constant 0 : index
    %c0_3 = arith.constant 0 : index
    %c0_4 = arith.constant 0 : index
    %21 = vector.load %arg5[%c0_2, %c0_3, %c0_4] : memref<1x8x128xf32, #tpu.memory_space<vmem>>, vector<1x8x128xf32>
    tpu.vector_store %arg5[%c0_2, %c0_3, %c0_4], %20 {strides = array<i32>} : memref<1x8x128xf32, #tpu.memory_space<vmem>>, vector<1x8x128xf32>,
    return
  }
  func.func @transform_0(%arg0: i32, %arg1: i32, %arg2: i32, %arg3: memref<4x4xi32, #tpu.memory_space<smem>>) -> (i32, i32, i32) {
    %0 = arith.index_cast %arg0 : i32 to index
    %1 = arith.index_cast %arg2 : i32 to index
    %2 = memref.load %arg3[%0, %1] : memref<4x4xi32, #tpu.memory_space<smem>>
    %c0_i32 = arith.constant 0 : i32
    return %arg0, %2, %arg1 : i32, i32, i32
  }
  func.func @transform_1(%arg0: i32, %arg1: i32, %arg2: i32, %arg3: memref<4x4xi32, #tpu.memory_space<smem>>) -> (i32, i32, i32) {
    %0 = arith.index_cast %arg0 : i32 to index
    %1 = arith.index_cast %arg2 : i32 to index
    %2 = memref.load %arg3[%0, %1] : memref<4x4xi32, #tpu.memory_space<smem>>
    %c0_i32 = arith.constant 0 : i32
    return %arg0, %2, %arg1 : i32, i32, i32
  }
}

</mosaic_0001>

<llo_original>
// kernel: tpu_custom_call.1
$region0: #{tpu_custom_call.1}
  #allocation0 [shape = 'u32[]', space=smem, size = 0x4, offset = 0x4, fixed_abs, tag = 'smem constant byte address 0x4 - core index']
  #allocation1 [shape = 'u32[144,128]{1,0:T(1,128)}', space=vmem, size = 0x12000, scoped, tag = 'internal scratch']
  #allocation2 [shape = 's32[1]{0}', space=sflag, size = 0x4, scoped, tag = 'scoped memory for tpu_custom_call.1']
  #allocation3 [shape = 'u8[2048]{0}', space=smem, size = 0x800, scoped, tag = 'prefetched SMEM operand 0']
  %s0 = inlined_call_operand.vmem [shape: s32[4,4], index: 0, kind: input, shape index: {}]
  %s1 = inlined_call_operand.hbm [shape: f32[4,64,128], index: 1, kind: input, shape index: {}, may-alias: {1,2}]
  %s2 = inlined_call_operand.hbm [shape: f32[4,64,128], index: 2, kind: output, shape index: {}, may-alias: {1,2}]
  %s3 = sld [smem:[#allocation0]]
  $region41: #{tpu_custom_call.1} parent=0
    _
  %s5 = ssub.s32 1, %s3
  %s6 = scalar_select 0, %s5, %s3
  %s7 = sshll.u32 %s0, 4
  %s8 = int_to_ptr.vmem [resolvable:$true] %s7
  %10 = dma.vmem_to_smem %s8, 64, [#allocation3], [#allocation2]
  %11 = dma.done [#allocation2], 64
  %12 = sfence
  $region1: #{tpu_custom_call.1} parent=0
    #allocation4 [shape = 'u8[8192]{0}', space=vmem, size = 0x2000, scoped, tag = 'input window, operand 1']
    #allocation5 [shape = 's32[2]{0}', space=sflag, size = 0x8, scoped, tag = 'scoped memory for tpu_custom_call.1']
    #allocation6 [shape = 's32[2]{0}', space=sflag, size = 0x8, scoped, tag = 'scoped memory for tpu_custom_call.1']
    #allocation7 [shape = 'u8[8192]{0}', space=vmem, size = 0x2000, scoped, tag = 'output window, operand 0']
    %13 = vsyncpa [#allocation5], 0
    %s14 = scalar_lea.sflag [#allocation5], 1
    %15 = vsyncpa %s14, 0
    %16 = vsyncpa [#allocation6], 0
    %s17 = scalar_lea.sflag [#allocation6], 1
    %18 = vsyncpa %s17, 0
    loop: start=0, step=1, limit=10
    $region2: #{tpu_custom_call.1} parent=1 // loop_pre_header
      _
    $region3: #{tpu_custom_call.1} parent=1 // loop_header
      %s20 = sphi 0, %s24
      %p21 = scmp.ge.s32.totalorder %s20, 10
      %s27 = sphi 0, %s46
      %s28 = sphi 0, %s42
      %s29 = sphi 0, %s38
      %s30 = sphi 0, %s27
      %s31 = sphi 0, %s28
      %s32 = sphi 0, %s29
      %s33 = sphi 0, %s30
      %s34 = sphi 0, %s31
      %s35 = sphi 0, %s32
      %s69 = sphi 0, %s71
      %s72 = sphi 0, %s69
      %s73 = sphi 0, %s72
      %s89 = sphi 0, %s73
      %s115 = sphi 0, %s117
      %s118 = sphi 0, %s115
      %s119 = sphi 0, %s118
      %s135 = sphi 0, %s119
    $region4: #{tpu_custom_call.1} parent=1 // loop_header_branch
      %23 = sbr.rel (%p21) target = $region8
    $region5: #{tpu_custom_call.1} parent=1 // loop_body
      %s25 = ssub.s32 %s20, 1
      %s26 = ssub.s32 %s20, 2
      %s36 = sadd.s32 1, %s29
      %p37 = scmp.ge.s32.totalorder %s36, 2
      %s38 = scalar_select %p37, 0, %s36
      %s39 = sadd.s32 1, %s28
      %s40 = scalar_select %p37, %s39, %s28
      %p41 = scmp.ge.s32.totalorder %s40, 1
      %s42 = scalar_select %p41, 0, %s40
      %s43 = sadd.s32 1, %s27
      %s44 = scalar_select %p41, %s43, %s27
      %p45 = scmp.ge.s32.totalorder %s44, 4
      %s46 = scalar_select %p45, 0, %s44
      %s47 = sshra.s32 %s29, 7
      %s48 = sand.u32 %s29, 127
      %s49 = sadd.s32 %s47, %s27
      %s50 = smul.u32 %s49, 128
      %s51 = sshra.s32 %s29, 7
      %s52 = sand.u32 %s29, 127
      %s53 = sadd.s32 %s50, %s52
      %s54 = sld [smem:[#allocation3 + %s53]]
      %s55 = sshra.s32 %s38, 7
      %s56 = sand.u32 %s38, 127
      %s57 = sadd.s32 %s55, %s46
      %s58 = smul.u32 %s57, 128
      %s59 = sshra.s32 %s38, 7
      %s60 = sand.u32 %s38, 127
      %s61 = sadd.s32 %s58, %s60
      %s62 = sld [smem:[#allocation3 + %s61]]
      %s63 = ssub.s32 %s27, %s46
      %s64 = ssub.s32 %s54, %s62
      %s65 = sor.u32 %s63, %s64
      %s66 = ssub.s32 %s28, %s42
      %s67 = sor.u32 %s65, %s66
      %p68 = scmp.eq.s32.totalorder %s67, 0
      %s70 = sadd.s32 %s69, 1
      %s71 = scalar_select %p68, %s69, %s70
      %p74 = pneg %p68
      %p75 = scmp.eq.s32.totalorder %s20, 7
      %p76 = por %p74, %p75
      %p77 = scmp.ne.s32.totalorder %s69, %s72
      %p78 = scmp.eq.s32.totalorder %s20, 0
      %p79 = por %p77, %p78
      %p80 = scmp.ne.s32.totalorder %s69, %s72
      %p81 = scmp.eq.s32.totalorder %s25, 7
      %p82 = por %p80, %p81
      %p83 = scmp.ne.s32.totalorder %s72, %s73
      %p84 = scmp.eq.s32.totalorder %s25, 0
      %p85 = por %p83, %p84
      %p86 = scmp.ne.s32.totalorder %s72, %s73
      %p87 = scmp.eq.s32.totalorder %s26, 7
      %p88 = por %p86, %p87
      %p90 = scmp.ne.s32.totalorder %s73, %s89
      %p91 = scmp.eq.s32.totalorder %s26, 0
      %p92 = por %p90, %p91
      %s93 = sshra.s32 %s29, 7
      %s94 = sand.u32 %s29, 127
      %s95 = sadd.s32 %s93, %s27
      %s96 = smul.u32 %s95, 128
      %s97 = sshra.s32 %s29, 7
      %s98 = sand.u32 %s29, 127
      %s99 = sadd.s32 %s96, %s98
      %s100 = sld [smem:[#allocation3 + %s99]]
      %s101 = sshra.s32 %s38, 7
      %s102 = sand.u32 %s38, 127
      %s103 = sadd.s32 %s101, %s46
      %s104 = smul.u32 %s103, 128
      %s105 = sshra.s32 %s38, 7
      %s106 = sand.u32 %s38, 127
      %s107 = sadd.s32 %s104, %s106
      %s108 = sld [smem:[#allocation3 + %s107]]
      %s109 = ssub.s32 %s27, %s46
      %s110 = ssub.s32 %s100, %s108
      %s111 = sor.u32 %s109, %s110
      %s112 = ssub.s32 %s28, %s42
      %s113 = sor.u32 %s111, %s112
      %p114 = scmp.eq.s32.totalorder %s113, 0
      %s116 = sadd.s32 %s115, 1
      %s117 = scalar_select %p114, %s115, %s116
      %p120 = pneg %p114
      %p121 = scmp.eq.s32.totalorder %s20, 7
      %p122 = por %p120, %p121
      %p123 = scmp.ne.s32.totalorder %s115, %s118
      %p124 = scmp.eq.s32.totalorder %s20, 0
      %p125 = por %p123, %p124
      %p126 = scmp.ne.s32.totalorder %s115, %s118
      %p127 = scmp.eq.s32.totalorder %s25, 7
      %p128 = por %p126, %p127
      %p129 = scmp.ne.s32.totalorder %s118, %s119
      %p130 = scmp.eq.s32.totalorder %s25, 0
      %p131 = por %p129, %p130
      %p132 = scmp.ne.s32.totalorder %s118, %s119
      %p133 = scmp.eq.s32.totalorder %s26, 7
      %p134 = por %p132, %p133
      %p136 = scmp.ne.s32.totalorder %s119, %s135
      %p137 = scmp.eq.s32.totalorder %s26, 0
      %p138 = por %p136, %p137
      %p139 = scmp.le.s32.totalorder 1, %s20
      %p140 = scmp.lt.s32.totalorder %s20, 9
      %p141 = pnand %p139, %p140
      %p142 = pneg %p141
      // Predicated region
      $region9: #{tpu_custom_call.1} parent=5 // pred_check
        _
      $region10: #{tpu_custom_call.1} parent=5 // pred_check_branch
        %144 = sbr.rel (%p141) target = $region12
      $region11: #{tpu_custom_call.1} parent=5 // pred_region
        %s145 = ssub.s32 %s20, 1
      $region12: #{tpu_custom_call.1} parent=5 // pred_fallthru
        _
      %p146 = scmp.lt.s32.totalorder %s20, 8
      // Predicated region
      $region13: #{tpu_custom_call.1} parent=5 // pred_check
        %p147 = pneg %p146
      $region14: #{tpu_custom_call.1} parent=5 // pred_check_branch
        %149 = sbr.rel (%p147) target = $region16
      $region15: #{tpu_custom_call.1} parent=5 // pred_region
        // Predicated region
        $region17: #{tpu_custom_call.1} parent=15 // pred_check
          %p150 = pneg %p79
        $region18: #{tpu_custom_call.1} parent=15 // pred_check_branch
          %152 = sbr.rel (%p150) target = $region20
        $region19: #{tpu_custom_call.1} parent=15 // pred_region
          %s153 = sand.u32 %s69, 1
          %s154 = scalar_lea.sflag [#allocation5], %s153
          %s155 = sand.u32 %s69, 1
          %s156 = smul.addr %s155, 8
          %s157 = scalar_lea.vmem [#allocation4], %s156
          %s158 = sshra.s32 %s29, 7
          %s159 = sand.u32 %s29, 127
          %s160 = sadd.s32 %s158, %s27
          %s161 = smul.u32 %s160, 128
          %s162 = sshra.s32 %s29, 7
          %s163 = sand.u32 %s29, 127
          %s164 = sadd.s32 %s161, %s163
          %s165 = sld [smem:[#allocation3 + %s164]]
          %s167 = ssub.s32 128, 128
          %168 = vsyncadd %s154, %s167
          %s169 = sadd.s32 %s28, %s165
          %s170 = smul.addr %s27, 8
          %s171 = sadd.s32 %s169, %s170
          %s172 = smul.addr %s171, 128
          %s173 = scalar_lea.hbm %s1, %s172
          %s175 = sshll.u32 %s157, 4
          %s176 = int_to_ptr.vmem [resolvable:$true] %s175
          %178 = dma.hbm_to_vmem [thread:$0]  %s173, 128, %s176, %s154
        $region20: #{tpu_custom_call.1} parent=15 // pred_fallthru
          _
      $region16: #{tpu_custom_call.1} parent=5 // pred_fallthru
        _
      %p179 = scmp.le.s32.totalorder 1, %s20
      %p180 = scmp.lt.s32.totalorder %s20, 9
      %p181 = pnand %p179, %p180
      %p182 = pneg %p181
      // Predicated region
      $region21: #{tpu_custom_call.1} parent=5 // pred_check
        _
      $region22: #{tpu_custom_call.1} parent=5 // pred_check_branch
        %184 = sbr.rel (%p181) target = $region24
      $region23: #{tpu_custom_call.1} parent=5 // pred_region
        %s185 = ssub.s32 %s20, 1
        %s186 = sand.u32 %s72, 1
        %s187 = scalar_lea.sflag [#allocation5], %s186
        %s188 = sand.u32 %s72, 1
        %s189 = smul.addr %s188, 8
        %s190 = scalar_lea.vmem [#allocation4], %s189
        // Predicated region
        $region25: #{tpu_custom_call.1} parent=23 // pred_check
          %p191 = pneg %p85
        $region26: #{tpu_custom_call.1} parent=23 // pred_check_branch
          %193 = sbr.rel (%p191) target = $region28
        $region27: #{tpu_custom_call.1} parent=23 // pred_region
          %194 = dma.done %s187, 128
        $region28: #{tpu_custom_call.1} parent=23 // pred_fallthru
          _
        %s195 = sand.u32 %s72, 1
        %s196 = scalar_lea.sflag [#allocation5], %s195
        %s197 = sand.u32 %s72, 1
        %s198 = smul.addr %s197, 8
        %s199 = scalar_lea.vmem [#allocation4], %s198
        %p200 = pneg %p85
        %p201 = pneg %p82
        %p202 = pneg %p131
        %p203 = pneg %p128
        %s204 = sand.u32 %s118, 1
        %s205 = scalar_lea.sflag [#allocation6], %s204
        %s206 = sand.u32 %s118, 1
        %s207 = smul.addr %s206, 8
        %s208 = scalar_lea.vmem [#allocation7], %s207
        %s209 = sshra.s32 %s32, 7
        %s210 = sand.u32 %s32, 127
        %s211 = sadd.s32 %s209, %s30
        %s212 = smul.u32 %s211, 128
        %s213 = sshra.s32 %s32, 7
        %s214 = sand.u32 %s32, 127
        %s215 = sadd.s32 %s212, %s214
        %s216 = sld [smem:[#allocation3 + %s215]]
        %s217 = sshra.s32 %s32, 7
        %s218 = sand.u32 %s32, 127
        %s219 = sadd.s32 %s217, %s30
        %s220 = smul.u32 %s219, 128
        %s221 = sshra.s32 %s32, 7
        %s222 = sand.u32 %s32, 127
        %s223 = sadd.s32 %s220, %s222
        %s224 = sld [smem:[#allocation3 + %s223]]
        %s225 = sshra.s32 %s32, 7
        %s226 = sand.u32 %s32, 127
        %s227 = sadd.s32 %s225, %s30
        %s228 = smul.u32 %s227, 128
        %s229 = sshra.s32 %s32, 7
        %s230 = sand.u32 %s32, 127
        %s231 = sadd.s32 %s228, %s230
        %s232 = sld [smem:[#allocation3 + %s231]]
        %s233 = smul.u32 %s232, 8
        %s234 = smul.u32 %s30, 128
        %s235 = sadd.s32 %s234, 2
        %s236 = sld [smem:[#allocation3 + %s235]]
        %s237 = sadd.s32 %s234, 3
        %s238 = sld [smem:[#allocation3 + %s237]]
        %v239 = vlaneseq
        %v240 = vshrl.u32 %v239, 7
        %v241 = vstv %s233
        %v242 = vadd.s32 %v241, %v240
        %v243 = vstv %s236
        %vm244 = vcmp.lt.s32.totalorder %v242, %v243
        %v245 = vstv %s238
        %vm246 = vcmp.ge.s32.totalorder %v242, %v245
        %vm247 = vmor %vm244, %vm246
        %v248 = vld [vmem:[%s190] sm:$0xff]
        %v249 = vsel %vm247, 1, 0
        %vm250 = vcmp.eq.s32.totalorder %v249, 1
        %v251 = vsel %vm250, %v248, 0.0
        %252 = vst [vmem:[%s208] sm:$0xff] %v251
        %s253 = sand.u32 %s118, 1
        %s254 = scalar_lea.sflag [#allocation6], %s253
        %s255 = sand.u32 %s118, 1
        %s256 = smul.addr %s255, 8
        %s257 = scalar_lea.vmem [#allocation7], %s256
        // Predicated region
        $region29: #{tpu_custom_call.1} parent=23 // pred_check
          %p258 = pneg %p128
        $region30: #{tpu_custom_call.1} parent=23 // pred_check_branch
          %260 = sbr.rel (%p258) target = $region32
        $region31: #{tpu_custom_call.1} parent=23 // pred_region
          %s261 = sshra.s32 %s32, 7
          %s262 = sand.u32 %s32, 127
          %s263 = sadd.s32 %s261, %s30
          %s264 = smul.u32 %s263, 128
          %s265 = sshra.s32 %s32, 7
          %s266 = sand.u32 %s32, 127
          %s267 = sadd.s32 %s264, %s266
          %s268 = sld [smem:[#allocation3 + %s267]]
          %s270 = ssub.s32 128, 128
          %271 = vsyncadd %s254, %s270
          %s272 = sadd.s32 %s31, %s268
          %s273 = smul.addr %s30, 8
          %s274 = sadd.s32 %s272, %s273
          %s275 = smul.addr %s274, 128
          %s276 = scalar_lea.hbm %s2, %s275
          %s278 = sshll.u32 %s257, 4
          %s279 = int_to_ptr.vmem [resolvable:$true] %s278
          %281 = dma.vmem_to_hbm [thread:$0]  %s279, 128, %s276, %s254
        $region32: #{tpu_custom_call.1} parent=23 // pred_fallthru
          _
      $region24: #{tpu_custom_call.1} parent=5 // pred_fallthru
        _
      %p282 = scmp.le.s32.totalorder 2, %s20
      // Predicated region
      $region33: #{tpu_custom_call.1} parent=5 // pred_check
        %p283 = pneg %p282
      $region34: #{tpu_custom_call.1} parent=5 // pred_check_branch
        %285 = sbr.rel (%p283) target = $region36
      $region35: #{tpu_custom_call.1} parent=5 // pred_region
        %s286 = ssub.s32 %s20, 2
        // Predicated region
        $region37: #{tpu_custom_call.1} parent=35 // pred_check
          %p287 = pneg %p134
        $region38: #{tpu_custom_call.1} parent=35 // pred_check_branch
          %289 = sbr.rel (%p287) target = $region40
        $region39: #{tpu_custom_call.1} parent=35 // pred_region
          %s290 = sand.u32 %s119, 1
          %s291 = scalar_lea.sflag [#allocation6], %s290
          %s292 = sand.u32 %s119, 1
          %s293 = smul.addr %s292, 8
          %s294 = scalar_lea.vmem [#allocation7], %s293
          %295 = dma.done %s291, 128
        $region40: #{tpu_custom_call.1} parent=35 // pred_fallthru
          _
      $region36: #{tpu_custom_call.1} parent=5 // pred_fallthru
        _
    $region6: #{tpu_custom_call.1} parent=1 // loop_footer
      %s24 = sadd.s32 1, %s20
    $region7: #{tpu_custom_call.1} parent=1 // loop_footer_branch
      %19 = sbr.rel target = $region3
    $region8: #{tpu_custom_call.1} parent=1 // loop_exit
      _
    %296 = vsyncpa [#allocation5], 1
    %s297 = scalar_lea.sflag [#allocation5], 1
    %298 = vsyncpa %s297, 1
    %299 = vsyncpa [#allocation6], 1
    %s300 = scalar_lea.sflag [#allocation6], 1
    %301 = vsyncpa %s300, 1

</llo_original>
